<compile_context>
chip_gen: v6e
topology: v6e:2x2x1
jax: 0.10.0
libtpu: 0.0.40
codegen_flags: <defaults>
</compile_context>

<pallas_src>
import jax
import jax.numpy as jnp
from jax.experimental import pallas as pl
from jax.experimental.pallas import tpu as pltpu

# physical constants from config
WHEEL_RADIUS = 0.033
WHEEL_BASE = 0.16          # (angular-velocity term exists in the module but is unused in the loss)
WHEEL_INERTIA = 0.00329
FRICTION_COEFF = 0.002
HIDDEN_DIMS = [64, 64, 32]
IN_DIM = 8                 # declared prev_dim in the PyTorch module
OUT_DIM = 4

MAX_TB = 2048              # upper bound on the batch (lane) tile

# Packed weight buffer layout (W_ROWS x 64), weights stored (out, in):
#   rows   0: 64, cols 0: 8  -> W1aug (64, 8)   (col 7 holds b1; ones input feature)
#   rows  64:128, cols 0:64  -> W2    (64, 64)
#   rows 128:192, cols 0:64  -> W3pad (64, 64)  (rows 32:64 zero)
#   rows 192:200, cols 0:64  -> W4pad (8, 64)   (only [0:4, 0:32] nonzero)
# Bias buffer (W_ROWS x 1): rows 64:128 = b2, 128:160 = b3, 192:196 = b4, rest 0.
W_ROWS = 200


def _pinn_kernel(x_ref, w_ref, b_ref, out_ref):
    x = x_ref[...]            # (8, TB): rows vel_l, vel_r, pos_l, pos_r, tq_l, tq_r, dt, ones

    # ---- dynamics_net MLP, batch on lanes ----
    # layer 1 (bias folded into W1aug column 7; input row 7 is ones)
    h = jnp.dot(w_ref[0:64, 0:8], x, preferred_element_type=jnp.float32)
    h = jnp.maximum(h, 0.0)                                               # (64, TB)

    # layer 2
    h = jnp.dot(w_ref[64:128, :], h, preferred_element_type=jnp.float32) + b_ref[64:128, :]
    h = jnp.maximum(h, 0.0)                                               # (64, TB)

    # layer 3 (output padded to 64 rows; rows 32:64 stay exactly zero)
    h = jnp.dot(w_ref[128:192, :], h, preferred_element_type=jnp.float32) + b_ref[128:192, :]
    h = jnp.maximum(h, 0.0)                                               # (64, TB)

    # layer 4 (padded to 8 output rows; rows 4:8 stay zero)
    pred8 = (jnp.dot(w_ref[192:200, :], h, preferred_element_type=jnp.float32)
             + b_ref[192:200, :])                                         # (8, TB)

    # ---- physics residuals: one value per batch element (lane) ----
    s_vl, s_vr = x[0:1, :], x[1:2, :]
    t_l, t_r = x[4:5, :], x[5:6, :]
    dt = x[6:7, :]
    p_vl, p_vr = pred8[0:1, :], pred8[1:2, :]

    v = (p_vr + p_vl) * (WHEEL_RADIUS * 0.5)
    kin = jnp.abs(v - (s_vl + s_vr) * 0.5)

    inv_dt = 1.0 / dt                                  # single reciprocal, reused twice
    accel_l = (p_vl - s_vl) * inv_dt
    accel_r = (p_vr - s_vr) * inv_dt
    res_l = jnp.abs(t_l - (WHEEL_INERTIA * accel_l + FRICTION_COEFF * s_vl))
    res_r = jnp.abs(t_r - (WHEEL_INERTIA * accel_r + FRICTION_COEFF * s_vr))
    res = kin + res_l + res_r                          # (1, TB)

    # single fused output: rows 0:4 predictions, row 4 physics residual (rows 5:7 zero)
    row = jax.lax.broadcasted_iota(jnp.int32, pred8.shape, 0)
    out_ref[...] = jnp.where(row == 4, jnp.broadcast_to(res, pred8.shape), pred8)


def _round_up(n, m):
    return ((n + m - 1) // m) * m


def _choose_tiling(batch):
    """Pick (tile, padded_batch). Aim for <=2 big 'parallel' grid steps."""
    b128 = _round_up(max(batch, 1), 128)
    if b128 <= 128:
        tb = 128
    elif b128 <= 2 * MAX_TB:
        tb = _round_up(-(-b128 // 2), 128)   # exactly 2 grid steps (v7x: one per TC)
    else:
        tb = MAX_TB
    return tb, _round_up(b128, tb)


@jax.jit
def wheel_dynamics_pinn_forward(state, torques, dt, wbuf, bbuf):
    """state: (B,4), torques: (B,2), dt: (B,) -> (predictions (B,4), physics_loss ())."""
    B = state.shape[0]
    tb, b_pad = _choose_tiling(B)
    pad = b_pad - B
    grid = (b_pad // tb,)

    state_f = state.astype(jnp.float32)
    torques_f = torques.astype(jnp.float32)
    dt_f = dt.astype(jnp.float32)

    # fused (B, 8) input: state | torques | dt | ones (bias feature)
    xb = jnp.concatenate(
        [state_f, torques_f, dt_f[:, None], jnp.ones((B, 1), jnp.float32)], axis=1)
    if pad:
        # padded lanes: dt = 1 (avoid 1/0), ones feature = 1, everything else 0
        pad_rows = jnp.zeros((pad, 8), jnp.float32).at[:, 6:8].set(1.0)
        xb = jnp.concatenate([xb, pad_rows], axis=0)
    x_t = xb.T                                          # (8, b_pad), batch on lanes

    flops = 2 * b_pad * (64 * 8 + 64 * 64 + 64 * 64 + 8 * 64) + 32 * b_pad
    bytes_accessed = 4 * (b_pad * (8 + 8) + W_ROWS * 65)

    out_t = pl.pallas_call(
        _pinn_kernel,
        grid=grid,
        in_specs=[
            pl.BlockSpec((8, tb), lambda i: (0, i)),          # fused input block
            pl.BlockSpec((W_ROWS, 64), lambda i: (0, 0)),     # packed weights (resident)
            pl.BlockSpec((W_ROWS, 1), lambda i: (0, 0)),      # packed biases  (resident)
        ],
        out_specs=pl.BlockSpec((8, tb), lambda i: (0, i)),    # fused predictions + residual
        out_shape=jax.ShapeDtypeStruct((8, b_pad), jnp.float32),
        compiler_params=pltpu.CompilerParams(dimension_semantics=("parallel",)),
        cost_estimate=pl.CostEstimate(flops=flops, transcendentals=0,
                                      bytes_accessed=bytes_accessed),
    )(x_t, wbuf, bbuf)

    predictions = out_t[0:4, :B].T                      # (B, 4)
    physics_loss = jnp.sum(out_t[4, :B]) / B            # == kin.mean() + dyn.mean()
    return predictions, physics_loss


def init_params(key):
    """PyTorch nn.Linear default init (uniform +-1/sqrt(fan_in)); weights are (out, in)."""
    dims = [IN_DIM] + HIDDEN_DIMS + [OUT_DIM]
    params = {}
    for i, (din, dout) in enumerate(zip(dims[:-1], dims[1:]), start=1):
        key, kw, kb = jax.random.split(key, 3)
        bound = 1.0 / (din ** 0.5)
        params[f"w{i}"] = jax.random.uniform(kw, (dout, din), jnp.float32, -bound, bound)
        params[f"b{i}"] = jax.random.uniform(kb, (dout,), jnp.float32, -bound, bound)
    return params


def pack_params(params):
    """Pack the 8 parameter tensors into (W_ROWS, 64) weights + (W_ROWS, 1) biases."""
    w1aug = params["w1"].at[:, 7].set(params["b1"])     # fold b1 into the dead 8th column
    wbuf = jnp.zeros((W_ROWS, 64), jnp.float32)
    wbuf = wbuf.at[0:64, 0:8].set(w1aug)
    wbuf = wbuf.at[64:128, 0:64].set(params["w2"])
    wbuf = wbuf.at[128:160, 0:64].set(params["w3"])
    wbuf = wbuf.at[192:196, 0:32].set(params["w4"])
    bbuf = jnp.zeros((W_ROWS, 1), jnp.float32)
    bbuf = bbuf.at[64:128, 0].set(params["b2"])
    bbuf = bbuf.at[128:160, 0].set(params["b3"])
    bbuf = bbuf.at[192:196, 0].set(params["b4"])
    return wbuf, bbuf


def _reference_forward(state, torques, dt, params):
    """Pure-JAX reference (mirrors the PyTorch module, zero-padded 8th input feature)."""
    B = state.shape[0]
    x = jnp.concatenate([state, torques, dt[:, None],
                         jnp.zeros((B, 1), jnp.float32)], axis=1)   # declared prev_dim = 8
    h = x
    for i in (1, 2, 3):
        h = jnp.maximum(h @ params[f"w{i}"].T + params[f"b{i}"], 0.0)
    pred = h @ params["w4"].T + params["b4"]

    v = (pred[:, 1] + pred[:, 0]) * WHEEL_RADIUS / 2.0
    kin = jnp.mean(jnp.abs(v - (state[:, 0] + state[:, 1]) / 2.0))
    accel_l = (pred[:, 0] - state[:, 0]) / dt
    accel_r = (pred[:, 1] - state[:, 1]) / dt
    trl = torques[:, 0] - (WHEEL_INERTIA * accel_l + FRICTION_COEFF * state[:, 0])
    trr = torques[:, 1] - (WHEEL_INERTIA * accel_r + FRICTION_COEFF * state[:, 1])
    dyn = jnp.mean(jnp.abs(trl) + jnp.abs(trr))
    return pred, kin + dyn


# TODO(synk): apply_torque / predict_next_state / ROS+threading control loop are host-side
# control logic with no Pallas equivalent; only the forward pass (training mode) is kerneled.

if __name__ == "__main__":
    key = jax.random.PRNGKey(0)
    kp, ks, kt, kd = jax.random.split(key, 4)

    params = init_params(kp)
    wbuf, bbuf = pack_params(params)

    def run_and_check(B, s_key, t_key, d_key):
        state = jax.random.normal(s_key, (B, 4), jnp.float32)
        torques = jax.random.normal(t_key, (B, 2), jnp.float32)
        dt = jax.random.uniform(d_key, (B,), jnp.float32, 0.01, 0.05)
        pred, loss = wheel_dynamics_pinn_forward(state, torques, dt, wbuf, bbuf)
        jax.block_until_ready((pred, loss))
        pred_ref, loss_ref = _reference_forward(state, torques, dt, params)
        assert pred.shape == (B, 4) and loss.shape == ()
        assert jnp.allclose(pred, pred_ref, rtol=2e-4, atol=2e-5), f"pred mismatch B={B}"
        assert jnp.allclose(loss, loss_ref, rtol=2e-4, atol=2e-5), f"loss mismatch B={B}"

    # B = config batch_size = 256 -> exercises the 2-step (128-lane) grid
    run_and_check(256, ks, kt, kd)
    # ragged small batch -> single-tile path with lane padding / masked mean
    run_and_check(37, kt, kd, ks)
    # larger ragged batch -> 256-lane tile, 2 parallel grid steps, internal pad lanes
    run_and_check(300, kd, ks, kt)

    print("KERNEL_OK")
</pallas_src>

<mosaic_0001>
module attributes {stable_mosaic.version = 11 : i64} {
  func.func @_pinn_kernel(%arg0: i32, %arg1: memref<8x128xf32, #tpu.memory_space<vmem>>, %arg2: memref<200x64xf32, #tpu.memory_space<vmem>>, %arg3: memref<200x1xf32, #tpu.memory_space<vmem>>, %arg4: memref<8x128xf32, #tpu.memory_space<vmem>>) attributes {dimension_semantics = [#tpu.dimension_semantics<parallel>], iteration_bounds = array<i64: 2>, scalar_prefetch = 0 : i64, scratch_operands = 0 : i64, tpu.core_type = #tpu.core_type<tc>, window_params = [{transform_indices = @transform_0, window_bounds = array<i64: 8, 128>}, {pipeline_mode = #tpu.pipeline_mode<synchronous>, transform_indices = @transform_1, window_bounds = array<i64: 200, 64>}, {pipeline_mode = #tpu.pipeline_mode<synchronous>, transform_indices = @transform_2, window_bounds = array<i64: 200, 1>}, {transform_indices = @transform_3, window_bounds = array<i64: 8, 128>}]} {
    %c0 = arith.constant 0 : index
    %c0_0 = arith.constant 0 : index
    %0 = vector.load %arg1[%c0, %c0_0] : memref<8x128xf32, #tpu.memory_space<vmem>>, vector<8x128xf32>
    %c0_1 = arith.constant 0 : index
    %c0_2 = arith.constant 0 : index
    %1 = vector.load %arg2[%c0_1, %c0_2] : memref<200x64xf32, #tpu.memory_space<vmem>>, vector<64x8xf32>
    %cst = arith.constant dense<0.000000e+00> : vector<64x128xf32>
    %2 = tpu.matmul %1, %0, %cst {dimension_numbers = #tpu.dot_dimension_numbers<[1], [0], [0], [1], [0, 0, 1, 1], [], []>} : vector<64x8xf32>, vector<8x128xf32>, vector<64x128xf32> -> vector<64x128xf32>
    %cst_3 = arith.constant 0.000000e+00 : f32
    %3 = vector.broadcast %cst_3 : f32 to vector<64x128xf32>
    %4 = arith.maximumf %2, %3 : vector<64x128xf32>
    %c64 = arith.constant 64 : index
    %c0_4 = arith.constant 0 : index
    %5 = vector.load %arg2[%c64, %c0_4] : memref<200x64xf32, #tpu.memory_space<vmem>>, vector<64x64xf32>
    %cst_5 = arith.constant dense<0.000000e+00> : vector<64x128xf32>
    %6 = tpu.matmul %5, %4, %cst_5 {dimension_numbers = #tpu.dot_dimension_numbers<[1], [0], [0], [1], [0, 0, 1, 1], [], []>} : vector<64x64xf32>, vector<64x128xf32>, vector<64x128xf32> -> vector<64x128xf32>
    %c64_6 = arith.constant 64 : index
    %c0_7 = arith.constant 0 : index
    %7 = vector.load %arg3[%c64_6, %c0_7] : memref<200x1xf32, #tpu.memory_space<vmem>>, vector<64x1xf32>
    %8 = vector.broadcast %7 : vector<64x1xf32> to vector<64x128xf32>
    %9 = arith.addf %6, %8 : vector<64x128xf32>
    %cst_8 = arith.constant 0.000000e+00 : f32
    %10 = vector.broadcast %cst_8 : f32 to vector<64x128xf32>
    %11 = arith.maximumf %9, %10 : vector<64x128xf32>
    %c128 = arith.constant 128 : index
    %c0_9 = arith.constant 0 : index
    %12 = vector.load %arg2[%c128, %c0_9] : memref<200x64xf32, #tpu.memory_space<vmem>>, vector<64x64xf32>
    %cst_10 = arith.constant dense<0.000000e+00> : vector<64x128xf32>
    %13 = tpu.matmul %12, %11, %cst_10 {dimension_numbers = #tpu.dot_dimension_numbers<[1], [0], [0], [1], [0, 0, 1, 1], [], []>} : vector<64x64xf32>, vector<64x128xf32>, vector<64x128xf32> -> vector<64x128xf32>
    %c128_11 = arith.constant 128 : index
    %c0_12 = arith.constant 0 : index
    %14 = vector.load %arg3[%c128_11, %c0_12] : memref<200x1xf32, #tpu.memory_space<vmem>>, vector<64x1xf32>
    %15 = vector.broadcast %14 : vector<64x1xf32> to vector<64x128xf32>
    %16 = arith.addf %13, %15 : vector<64x128xf32>
    %cst_13 = arith.constant 0.000000e+00 : f32
    %17 = vector.broadcast %cst_13 : f32 to vector<64x128xf32>
    %18 = arith.maximumf %16, %17 : vector<64x128xf32>
    %c192 = arith.constant 192 : index
    %c0_14 = arith.constant 0 : index
    %19 = vector.load %arg2[%c192, %c0_14] : memref<200x64xf32, #tpu.memory_space<vmem>>, vector<8x64xf32>
    %cst_15 = arith.constant dense<0.000000e+00> : vector<8x128xf32>
    %20 = tpu.matmul %19, %18, %cst_15 {dimension_numbers = #tpu.dot_dimension_numbers<[1], [0], [0], [1], [0, 0, 1, 1], [], []>} : vector<8x64xf32>, vector<64x128xf32>, vector<8x128xf32> -> vector<8x128xf32>
    %c192_16 = arith.constant 192 : index
    %c0_17 = arith.constant 0 : index
    %21 = vector.load %arg3[%c192_16, %c0_17] : memref<200x1xf32, #tpu.memory_space<vmem>>, vector<8x1xf32>
    %22 = vector.broadcast %21 : vector<8x1xf32> to vector<8x128xf32>
    %23 = arith.addf %20, %22 : vector<8x128xf32>
    %24 = vector.extract_strided_slice %0 {offsets = [0, 0], sizes = [1, 128], strides = [1, 1]} : vector<8x128xf32> to vector<1x128xf32>
    %25 = vector.extract_strided_slice %0 {offsets = [1, 0], sizes = [1, 128], strides = [1, 1]} : vector<8x128xf32> to vector<1x128xf32>
    %26 = vector.extract_strided_slice %0 {offsets = [4, 0], sizes = [1, 128], strides = [1, 1]} : vector<8x128xf32> to vector<1x128xf32>
    %27 = vector.extract_strided_slice %0 {offsets = [5, 0], sizes = [1, 128], strides = [1, 1]} : vector<8x128xf32> to vector<1x128xf32>
    %28 = vector.extract_strided_slice %0 {offsets = [6, 0], sizes = [1, 128], strides = [1, 1]} : vector<8x128xf32> to vector<1x128xf32>
    %29 = vector.extract_strided_slice %23 {offsets = [0, 0], sizes = [1, 128], strides = [1, 1]} : vector<8x128xf32> to vector<1x128xf32>
    %30 = vector.extract_strided_slice %23 {offsets = [1, 0], sizes = [1, 128], strides = [1, 1]} : vector<8x128xf32> to vector<1x128xf32>
    %31 = arith.addf %30, %29 : vector<1x128xf32>
    %cst_18 = arith.constant 1.650000e-02 : f32
    %32 = vector.broadcast %cst_18 : f32 to vector<1x128xf32>
    %33 = arith.mulf %31, %32 : vector<1x128xf32>
    %34 = arith.addf %24, %25 : vector<1x128xf32>
    %cst_19 = arith.constant 5.000000e-01 : f32
    %35 = vector.broadcast %cst_19 : f32 to vector<1x128xf32>
    %36 = arith.mulf %34, %35 : vector<1x128xf32>
    %37 = arith.subf %33, %36 : vector<1x128xf32>
    %38 = math.absf %37 : vector<1x128xf32>
    %cst_20 = arith.constant 1.000000e+00 : f32
    %39 = vector.broadcast %cst_20 : f32 to vector<1x128xf32>
    %40 = arith.divf %39, %28 : vector<1x128xf32>
    %41 = arith.subf %29, %24 : vector<1x128xf32>
    %42 = arith.mulf %41, %40 : vector<1x128xf32>
    %43 = arith.subf %30, %25 : vector<1x128xf32>
    %44 = arith.mulf %43, %40 : vector<1x128xf32>
    %cst_21 = arith.constant 3.290000e-03 : f32
    %45 = vector.broadcast %cst_21 : f32 to vector<1x128xf32>
    %46 = arith.mulf %45, %42 : vector<1x128xf32>
    %cst_22 = arith.constant 2.000000e-03 : f32
    %47 = vector.broadcast %cst_22 : f32 to vector<1x128xf32>
    %48 = arith.mulf %47, %24 : vector<1x128xf32>
    %49 = arith.addf %46, %48 : vector<1x128xf32>
    %50 = arith.subf %26, %49 : vector<1x128xf32>
    %51 = math.absf %50 : vector<1x128xf32>
    %cst_23 = arith.constant 3.290000e-03 : f32
    %52 = vector.broadcast %cst_23 : f32 to vector<1x128xf32>
    %53 = arith.mulf %52, %44 : vector<1x128xf32>
    %cst_24 = arith.constant 2.000000e-03 : f32
    %54 = vector.broadcast %cst_24 : f32 to vector<1x128xf32>
    %55 = arith.mulf %54, %25 : vector<1x128xf32>
    %56 = arith.addf %53, %55 : vector<1x128xf32>
    %57 = arith.subf %27, %56 : vector<1x128xf32>
    %58 = math.absf %57 : vector<1x128xf32>
    %59 = arith.addf %38, %51 : vector<1x128xf32>
    %60 = arith.addf %59, %58 : vector<1x128xf32>
    %61 = tpu.iota {dimensions = array<i32: 0>} : vector<8x128xi32>
    %c4_i32 = arith.constant 4 : i32
    %62 = vector.broadcast %c4_i32 : i32 to vector<8x128xi32>
    %63 = arith.cmpi eq, %61, %62 : vector<8x128xi32>
    %64 = vector.shape_cast %60 : vector<1x128xf32> to vector<1x128xf32>
    %65 = vector.broadcast %64 : vector<1x128xf32> to vector<8x128xf32>
    %66 = arith.select %63, %65, %23 : vector<8x128xi1>, vector<8x128xf32>
    %c0_25 = arith.constant 0 : index
    %c0_26 = arith.constant 0 : index
    %67 = vector.load %arg4[%c0_25, %c0_26] : memref<8x128xf32, #tpu.memory_space<vmem>>, vector<8x128xf32>
    tpu.vector_store %arg4[%c0_25, %c0_26], %66 {strides = array<i32>} : memref<8x128xf32, #tpu.memory_space<vmem>>, vector<8x128xf32>,
    return
  }
  func.func @transform_0(%arg0: i32) -> (i32, i32) {
    %c0_i32 = arith.constant 0 : i32
    %c0_i32_0 = arith.constant 0 : i32
    return %c0_i32, %arg0 : i32, i32
  }
  func.func @transform_1(%arg0: i32) -> (i32, i32) {
    %c0_i32 = arith.constant 0 : i32
    %c0_i32_0 = arith.constant 0 : i32
    %c0_i32_1 = arith.constant 0 : i32
    return %c0_i32, %c0_i32_0 : i32, i32
  }
  func.func @transform_2(%arg0: i32) -> (i32, i32) {
    %c0_i32 = arith.constant 0 : i32
    %c0_i32_0 = arith.constant 0 : i32
    %c0_i32_1 = arith.constant 0 : i32
    return %c0_i32, %c0_i32_0 : i32, i32
  }
  func.func @transform_3(%arg0: i32) -> (i32, i32) {
    %c0_i32 = arith.constant 0 : i32
    %c0_i32_0 = arith.constant 0 : i32
    return %c0_i32, %arg0 : i32, i32
  }
}

</mosaic_0001>

<llo_original>
// kernel: wheel_dynamics_pinn_forward.1
$region0: #{wheel_dynamics_pinn_forward.1}
  #allocation0 [shape = 'u32[]', space=smem, size = 0x4, offset = 0x4, fixed_abs, tag = 'smem constant byte address 0x4 - core index']
  #allocation1 [shape = 'u32[144,128]{1,0:T(1,128)}', space=vmem, size = 0x12000, scoped, tag = 'internal scratch']
  %s0 = inlined_call_operand.vmem [shape: f32[8,256], index: 0, kind: input, shape index: {}]
  %s1 = inlined_call_operand.vmem [shape: f32[200,64], index: 1, kind: input, shape index: {}]
  %s2 = inlined_call_operand.vmem [shape: f32[200,1], index: 2, kind: input, shape index: {}]
  %s3 = inlined_call_operand.vmem [shape: f32[8,256], index: 3, kind: output, shape index: {}]
  %s4 = sld [smem:[#allocation0]]
  $region45: #{wheel_dynamics_pinn_forward.1} parent=0
    _
  %s6 = ssub.s32 1, %s4
  %s7 = scalar_select 0, %s6, %s4
  loop: start=0, step=1, limit=4
  $region2: #{wheel_dynamics_pinn_forward.1} parent=0 // loop_pre_header
    _
  $region3: #{wheel_dynamics_pinn_forward.1} parent=0 // loop_header
    %s9 = sphi 0, %s13
    %p10 = scmp.ge.s32.totalorder %s9, 4
    %s19 = sphi 0, %s21
    %s22 = sphi 0, %s19
    %s23 = sphi 0, %s22
    %s39 = sphi 0, %s23
    %s43 = sphi 0, %s43
    %s45 = sphi 0, %s43
    %s46 = sphi 0, %s45
    %s60 = sphi 0, %s46
    %s64 = sphi 0, %s64
    %s66 = sphi 0, %s64
    %s67 = sphi 0, %s66
    %s81 = sphi 0, %s67
    %s87 = sphi 0, %s89
    %s90 = sphi 0, %s87
    %s91 = sphi 0, %s90
    %s107 = sphi 0, %s91
  $region4: #{wheel_dynamics_pinn_forward.1} parent=0 // loop_header_branch
    %12 = sbr.rel (%p10) target = $region8
  $region5: #{wheel_dynamics_pinn_forward.1} parent=0 // loop_body
    %s14 = ssub.s32 %s9, 1
    %s15 = ssub.s32 %s9, 2
    %s16 = sadd.s32 %s9, 1
    %s17 = ssub.s32 %s9, %s16
    %p18 = scmp.eq.s32.totalorder %s17, 0
    %s20 = sadd.s32 %s19, 1
    %s21 = scalar_select %p18, %s19, %s20
    %p24 = pneg %p18
    %p25 = scmp.eq.s32.totalorder %s9, 1
    %p26 = por %p24, %p25
    %p27 = scmp.ne.s32.totalorder %s19, %s22
    %p28 = scmp.eq.s32.totalorder %s9, 0
    %p29 = por %p27, %p28
    %p30 = scmp.ne.s32.totalorder %s19, %s22
    %p31 = scmp.eq.s32.totalorder %s14, 1
    %p32 = por %p30, %p31
    %p33 = scmp.ne.s32.totalorder %s22, %s23
    %p34 = scmp.eq.s32.totalorder %s14, 0
    %p35 = por %p33, %p34
    %p36 = scmp.ne.s32.totalorder %s22, %s23
    %p37 = scmp.eq.s32.totalorder %s15, 1
    %p38 = por %p36, %p37
    %p40 = scmp.ne.s32.totalorder %s23, %s39
    %p41 = scmp.eq.s32.totalorder %s15, 0
    %p42 = por %p40, %p41
    %s44 = sadd.s32 %s43, 1
    %p47 = scmp.eq.s32.totalorder %s9, 1
    %p48 = scmp.ne.s32.totalorder %s43, %s45
    %p49 = scmp.eq.s32.totalorder %s9, 0
    %p50 = por %p48, %p49
    %p51 = scmp.ne.s32.totalorder %s43, %s45
    %p52 = scmp.eq.s32.totalorder %s14, 1
    %p53 = por %p51, %p52
    %p54 = scmp.ne.s32.totalorder %s45, %s46
    %p55 = scmp.eq.s32.totalorder %s14, 0
    %p56 = por %p54, %p55
    %p57 = scmp.ne.s32.totalorder %s45, %s46
    %p58 = scmp.eq.s32.totalorder %s15, 1
    %p59 = por %p57, %p58
    %p61 = scmp.ne.s32.totalorder %s46, %s60
    %p62 = scmp.eq.s32.totalorder %s15, 0
    %p63 = por %p61, %p62
    %s65 = sadd.s32 %s64, 1
    %p68 = scmp.eq.s32.totalorder %s9, 1
    %p69 = scmp.ne.s32.totalorder %s64, %s66
    %p70 = scmp.eq.s32.totalorder %s9, 0
    %p71 = por %p69, %p70
    %p72 = scmp.ne.s32.totalorder %s64, %s66
    %p73 = scmp.eq.s32.totalorder %s14, 1
    %p74 = por %p72, %p73
    %p75 = scmp.ne.s32.totalorder %s66, %s67
    %p76 = scmp.eq.s32.totalorder %s14, 0
    %p77 = por %p75, %p76
    %p78 = scmp.ne.s32.totalorder %s66, %s67
    %p79 = scmp.eq.s32.totalorder %s15, 1
    %p80 = por %p78, %p79
    %p82 = scmp.ne.s32.totalorder %s67, %s81
    %p83 = scmp.eq.s32.totalorder %s15, 0
    %p84 = por %p82, %p83
    %s85 = ssub.s32 %s9, %s16
    %p86 = scmp.eq.s32.totalorder %s85, 0
    %s88 = sadd.s32 %s87, 1
    %s89 = scalar_select %p86, %s87, %s88
    %p92 = pneg %p86
    %p93 = scmp.eq.s32.totalorder %s9, 1
    %p94 = por %p92, %p93
    %p95 = scmp.ne.s32.totalorder %s87, %s90
    %p96 = scmp.eq.s32.totalorder %s9, 0
    %p97 = por %p95, %p96
    %p98 = scmp.ne.s32.totalorder %s87, %s90
    %p99 = scmp.eq.s32.totalorder %s14, 1
    %p100 = por %p98, %p99
    %p101 = scmp.ne.s32.totalorder %s90, %s91
    %p102 = scmp.eq.s32.totalorder %s14, 0
    %p103 = por %p101, %p102
    %p104 = scmp.ne.s32.totalorder %s90, %s91
    %p105 = scmp.eq.s32.totalorder %s15, 1
    %p106 = por %p104, %p105
    %p108 = scmp.ne.s32.totalorder %s91, %s107
    %p109 = scmp.eq.s32.totalorder %s15, 0
    %p110 = por %p108, %p109
    %p111 = scmp.le.s32.totalorder 1, %s9
    %p112 = scmp.lt.s32.totalorder %s9, 3
    %p113 = pnand %p111, %p112
    %p114 = pneg %p113
    // Predicated region
    $region9: #{wheel_dynamics_pinn_forward.1} parent=5 // pred_check
      _
    $region10: #{wheel_dynamics_pinn_forward.1} parent=5 // pred_check_branch
      %116 = sbr.rel (%p113) target = $region12
    $region11: #{wheel_dynamics_pinn_forward.1} parent=5 // pred_region
      %s117 = ssub.s32 %s9, 1
      // Predicated region
      $region13: #{wheel_dynamics_pinn_forward.1} parent=11 // pred_check
        %p118 = pneg %p56
      $region14: #{wheel_dynamics_pinn_forward.1} parent=11 // pred_check_branch
        %120 = sbr.rel (%p118) target = $region16
      $region15: #{wheel_dynamics_pinn_forward.1} parent=11 // pred_region
        _
      $region16: #{wheel_dynamics_pinn_forward.1} parent=11 // pred_fallthru
        _
      // Predicated region
      $region17: #{wheel_dynamics_pinn_forward.1} parent=11 // pred_check
        %p121 = pneg %p77
      $region18: #{wheel_dynamics_pinn_forward.1} parent=11 // pred_check_branch
        %123 = sbr.rel (%p121) target = $region20
      $region19: #{wheel_dynamics_pinn_forward.1} parent=11 // pred_region
        _
      $region20: #{wheel_dynamics_pinn_forward.1} parent=11 // pred_fallthru
        _
    $region12: #{wheel_dynamics_pinn_forward.1} parent=5 // pred_fallthru
      _
    %p124 = scmp.lt.s32.totalorder %s9, 2
    // Predicated region
    $region21: #{wheel_dynamics_pinn_forward.1} parent=5 // pred_check
      %p125 = pneg %p124
    $region22: #{wheel_dynamics_pinn_forward.1} parent=5 // pred_check_branch
      %127 = sbr.rel (%p125) target = $region24
    $region23: #{wheel_dynamics_pinn_forward.1} parent=5 // pred_region
      // Predicated region
      $region25: #{wheel_dynamics_pinn_forward.1} parent=23 // pred_check
        %p128 = pneg %p29
      $region26: #{wheel_dynamics_pinn_forward.1} parent=23 // pred_check_branch
        %130 = sbr.rel (%p128) target = $region28
      $region27: #{wheel_dynamics_pinn_forward.1} parent=23 // pred_region
        %p131 = scmp.lt.s32.totalorder %s9, 1
        %s132 = scalar_select %p131, %s9, 1
        %s133 = smul.addr %s132, 8
        %s134 = scalar_lea.vmem %s0, %s133
      $region28: #{wheel_dynamics_pinn_forward.1} parent=23 // pred_fallthru
        _
    $region24: #{wheel_dynamics_pinn_forward.1} parent=5 // pred_fallthru
      _
    %p135 = scmp.le.s32.totalorder 1, %s9
    %p136 = scmp.lt.s32.totalorder %s9, 3
    %p137 = pnand %p135, %p136
    %p138 = pneg %p137
    // Predicated region
    $region29: #{wheel_dynamics_pinn_forward.1} parent=5 // pred_check
      _
    $region30: #{wheel_dynamics_pinn_forward.1} parent=5 // pred_check_branch
      %140 = sbr.rel (%p137) target = $region32
    $region31: #{wheel_dynamics_pinn_forward.1} parent=5 // pred_region
      %s141 = ssub.s32 %s9, 1
      %p142 = scmp.lt.s32.totalorder %s14, 1
      %s143 = scalar_select %p142, %s14, 1
      %s144 = smul.addr %s143, 8
      %s145 = scalar_lea.vmem %s0, %s144
      %p146 = pneg %p35
      %p147 = pneg %p32
      %p148 = pneg %p56
      %p149 = pneg %p53
      %p150 = pneg %p77
      %p151 = pneg %p74
      %p152 = pneg %p103
      %p153 = pneg %p100
      %p154 = scmp.lt.s32.totalorder %s14, 1
      %s155 = scalar_select %p154, %s14, 1
      %s156 = smul.addr %s155, 8
      %s157 = scalar_lea.vmem %s3, %s156
      %p158 = scmp.lt.s32.totalorder %s14, 1
      %s159 = scalar_select %p158, %s14, 1
      %s160 = smul.addr %s159, 8
      %s161 = scalar_lea.vmem %s0, %s160
      %p162 = scmp.lt.s32.totalorder %s14, 1
      %s163 = scalar_select %p162, %s14, 1
      %s164 = smul.addr %s163, 8
      %s165 = scalar_lea.vmem %s3, %s164
      %v166 = vld [vmem:[%s161] sm:$0xff]
      %v167 = vld [vmem:[%s1] sm:$0xff]
      %v168 = vld [vmem:[%s1 + $0x8] sm:$0xff]
      %v169 = vld [vmem:[%s1 + $0x10] sm:$0xff]
      %v170 = vld [vmem:[%s1 + $0x18] sm:$0xff]
      %v171 = vld [vmem:[%s1 + $0x20] sm:$0xff]
      %v172 = vld [vmem:[%s1 + $0x28] sm:$0xff]
      %v173 = vld [vmem:[%s1 + $0x30] sm:$0xff]
      %v174 = vld [vmem:[%s1 + $0x38] sm:$0xff]
      %vm175 = vcmask 64512
      %v177 = vsel %vm175, %v167, 0
      %v180 = vsel %vm175, %v168, 0
      %v183 = vsel %vm175, %v169, 0
      %v186 = vsel %vm175, %v170, 0
      %v189 = vsel %vm175, %v171, 0
      %v192 = vsel %vm175, %v172, 0
      %v195 = vsel %vm175, %v173, 0
      %v198 = vsel %vm175, %v174, 0
      %200 = vmatprep.subr.mxu0 0.0
      %201 = vmatpush1.msra.mxu0 0.0
      %202 = vmatprep.subr.mxu0 0.0
      %203 = vmatpush1.msra.mxu0 0.0
      %204 = vmatprep.subr.mxu0 0.0
      %205 = vmatpush1.msra.mxu0 0.0
      %206 = vmatprep.subr.mxu0 0.0
      %207 = vmatpush1.msra.mxu0 0.0
      %208 = vmatprep.subr.mxu0 0.0
      %209 = vmatpush1.msra.mxu0 0.0
      %210 = vmatprep.subr.mxu0 0.0
      %211 = vmatpush1.msra.mxu0 0.0
      %212 = vmatprep.subr.mxu0 0.0
      %213 = vmatpush1.msra.mxu0 0.0
      %214 = vmatprep.subr.mxu0 0.0
      %215 = vmatpush1.msra.mxu0 0.0
      %216 = vmatprep.subr.mxu0 0.0
      %217 = vmatpush1.msra.mxu0 0.0
      %218 = vmatprep.subr.mxu0 0.0
      %219 = vmatpush1.msra.mxu0 0.0
      %220 = vmatprep.subr.mxu0 0.0
      %221 = vmatpush1.msra.mxu0 0.0
      %222 = vmatprep.subr.mxu0 0.0
      %223 = vmatpush1.msra.mxu0 0.0
      %224 = vmatprep.subr.mxu0 0.0
      %225 = vmatpush1.msra.mxu0 0.0
      %226 = vmatprep.subr.mxu0 0.0
      %227 = vmatpush1.msra.mxu0 0.0
      %228 = vmatprep.subr.mxu0 0.0
      %229 = vmatpush1.msra.mxu0 0.0
      %230 = vmatprep.subr.mxu0 0.0
      %231 = vmatpush1.msra.mxu0 %v166
      %232 = vmatprep.subr.mxu0 0.0
      %233 = vmatpush2.msra.mxu0 0.0
      %234 = vmatprep.subr.mxu0 0.0
      %235 = vmatpush2.msra.mxu0 0.0
      %236 = vmatprep.subr.mxu0 0.0
      %237 = vmatpush2.msra.mxu0 0.0
      %238 = vmatprep.subr.mxu0 0.0
      %239 = vmatpush2.msra.mxu0 0.0
      %240 = vmatprep.subr.mxu0 0.0
      %241 = vmatpush2.msra.mxu0 0.0
      %242 = vmatprep.subr.mxu0 0.0
      %243 = vmatpush2.msra.mxu0 0.0
      %244 = vmatprep.subr.mxu0 0.0
      %245 = vmatpush2.msra.mxu0 0.0
      %246 = vmatprep.subr.mxu0 0.0
      %247 = vmatpush2.msra.mxu0 0.0
      %248 = vmatprep.subr.mxu0 0.0
      %249 = vmatpush2.msra.mxu0 0.0
      %250 = vmatprep.subr.mxu0 0.0
      %251 = vmatpush2.msra.mxu0 0.0
      %252 = vmatprep.subr.mxu0 0.0
      %253 = vmatpush2.msra.mxu0 0.0
      %254 = vmatprep.subr.mxu0 0.0
      %255 = vmatpush2.msra.mxu0 0.0
      %256 = vmatprep.subr.mxu0 0.0
      %257 = vmatpush2.msra.mxu0 0.0
      %258 = vmatprep.subr.mxu0 0.0
      %259 = vmatpush2.msra.mxu0 0.0
      %260 = vmatprep.subr.mxu0 0.0
      %261 = vmatpush2.msra.mxu0 0.0
      %262 = vmatprep.subr.mxu0 0.0
      %263 = vmatpush2.msra.mxu0 0.0
      %264 = vmatprep.mubr.f32.mxu0 0.0
      %265 = vmatmul.mubr.f32.gmra.mxu0 %v177
      %v266 = vpop.f32.mrf.mxu0
      %v267 = vadd.f32 0.0, %v266
      %v268 = vpop.f32.mrf.mxu0
      %269 = vmatprep.mubr.f32.mxu0 0.0
      %270 = vmatmul.mubr.f32.gmra.mxu0 %v180
      %v271 = vpop.f32.mrf.mxu0
      %v272 = vadd.f32 0.0, %v271
      %v273 = vpop.f32.mrf.mxu0
      %274 = vmatprep.mubr.f32.mxu0 0.0
      %275 = vmatmul.mubr.f32.gmra.mxu0 %v183
      %v276 = vpop.f32.mrf.mxu0
      %v277 = vadd.f32 0.0, %v276
      %v278 = vpop.f32.mrf.mxu0
      %279 = vmatprep.mubr.f32.mxu0 0.0
      %280 = vmatmul.mubr.f32.gmra.mxu0 %v186
      %v281 = vpop.f32.mrf.mxu0
      %v282 = vadd.f32 0.0, %v281
      %v283 = vpop.f32.mrf.mxu0
      %284 = vmatprep.mubr.f32.mxu0 0.0
      %285 = vmatmul.mubr.f32.gmra.mxu0 %v189
      %v286 = vpop.f32.mrf.mxu0
      %v287 = vadd.f32 0.0, %v286
      %v288 = vpop.f32.mrf.mxu0
      %289 = vmatprep.mubr.f32.mxu0 0.0
      %290 = vmatmul.mubr.f32.gmra.mxu0 %v192
      %v291 = vpop.f32.mrf.mxu0
      %v292 = vadd.f32 0.0, %v291
      %v293 = vpop.f32.mrf.mxu0
      %294 = vmatprep.mubr.f32.mxu0 0.0
      %295 = vmatmul.mubr.f32.gmra.mxu0 %v195
      %v296 = vpop.f32.mrf.mxu0
      %v297 = vadd.f32 0.0, %v296
      %v298 = vpop.f32.mrf.mxu0
      %299 = vmatprep.mubr.f32.mxu0 0.0
      %300 = vmatmul.mubr.f32.gmra.mxu0 %v198
      %v301 = vpop.f32.mrf.mxu0
      %v302 = vadd.f32 0.0, %v301
      %v303 = vpop.f32.mrf.mxu0
      %304 = vdwg.mxu0
      %v305 = vmax.f32 %v267, 0.0
      %v306 = vmax.f32 %v272, 0.0
      %v307 = vmax.f32 %v277, 0.0
      %v308 = vmax.f32 %v282, 0.0
      %v309 = vmax.f32 %v287, 0.0
      %v310 = vmax.f32 %v292, 0.0
      %v311 = vmax.f32 %v297, 0.0
      %v312 = vmax.f32 %v302, 0.0
      %v313 = vld [vmem:[%s1 + $0x40] sm:$0xff]
      %v314 = vld [vmem:[%s1 + $0x48] sm:$0xff]
      %v315 = vld [vmem:[%s1 + $0x50] sm:$0xff]
      %v316 = vld [vmem:[%s1 + $0x58] sm:$0xff]
      %v317 = vld [vmem:[%s1 + $0x60] sm:$0xff]
      %v318 = vld [vmem:[%s1 + $0x68] sm:$0xff]
      %v319 = vld [vmem:[%s1 + $0x70] sm:$0xff]
      %v320 = vld [vmem:[%s1 + $0x78] sm:$0xff]
      %v321 = vld [vmem:[%s2 + $0x40] sm:$0xff]
      %v322 = vld [vmem:[%s2 + $0x48] sm:$0xff]
      %v323 = vld [vmem:[%s2 + $0x50] sm:$0xff]
      %v324 = vld [vmem:[%s2 + $0x58] sm:$0xff]
      %v325 = vld [vmem:[%s2 + $0x60] sm:$0xff]
      %v326 = vld [vmem:[%s2 + $0x68] sm:$0xff]
      %v327 = vld [vmem:[%s2 + $0x70] sm:$0xff]
      %v328 = vld [vmem:[%s2 + $0x78] sm:$0xff]
      %330 = vset.pattern.permute.xlu0 0
      %331 = vperm.xlu0 %330, %v321
      %v332 = vpop.permute.xlu0 %331
      %335 = vset.pattern.permute.xlu0 0
      %336 = vperm.xlu0 %335, %v322
      %v337 = vpop.permute.xlu0 %336
      %340 = vset.pattern.permute.xlu0 0
      %341 = vperm.xlu0 %340, %v323
      %v342 = vpop.permute.xlu0 %341
      %345 = vset.pattern.permute.xlu0 0
      %346 = vperm.xlu0 %345, %v324
      %v347 = vpop.permute.xlu0 %346
      %350 = vset.pattern.permute.xlu0 0
      %351 = vperm.xlu0 %350, %v325
      %v352 = vpop.permute.xlu0 %351
      %355 = vset.pattern.permute.xlu0 0
      %356 = vperm.xlu0 %355, %v326
      %v357 = vpop.permute.xlu0 %356
      %360 = vset.pattern.permute.xlu0 0
      %361 = vperm.xlu0 %360, %v327
      %v362 = vpop.permute.xlu0 %361
      %365 = vset.pattern.permute.xlu0 0
      %366 = vperm.xlu0 %365, %v328
      %v367 = vpop.permute.xlu0 %366
      %vm369 = vcmask 523264
      %v371 = vsel %vm369, %v313, 0
      %v374 = vsel %vm369, %v314, 0
      %v377 = vsel %vm369, %v315, 0
      %v380 = vsel %vm369, %v316, 0
      %v383 = vsel %vm369, %v317, 0
      %v386 = vsel %vm369, %v318, 0
      %v389 = vsel %vm369, %v319, 0
      %v392 = vsel %vm369, %v320, 0
      %394 = vmatprep.subr.mxu0 0.0
      %395 = vmatpush1.msra.mxu0 0.0
      %396 = vmatprep.subr.mxu0 0.0
      %397 = vmatpush1.msra.mxu0 0.0
      %398 = vmatprep.subr.mxu0 0.0
      %399 = vmatpush1.msra.mxu0 0.0
      %400 = vmatprep.subr.mxu0 0.0
      %401 = vmatpush1.msra.mxu0 0.0
      %402 = vmatprep.subr.mxu0 0.0
      %403 = vmatpush1.msra.mxu0 0.0
      %404 = vmatprep.subr.mxu0 0.0
      %405 = vmatpush1.msra.mxu0 0.0
      %406 = vmatprep.subr.mxu0 0.0
      %407 = vmatpush1.msra.mxu0 0.0
      %408 = vmatprep.subr.mxu0 0.0
      %409 = vmatpush1.msra.mxu0 0.0
      %410 = vmatprep.subr.mxu0 0.0
      %411 = vmatpush1.msra.mxu0 %v312
      %412 = vmatprep.subr.mxu0 0.0
      %413 = vmatpush1.msra.mxu0 %v311
      %414 = vmatprep.subr.mxu0 0.0
      %415 = vmatpush1.msra.mxu0 %v310
      %416 = vmatprep.subr.mxu0 0.0
      %417 = vmatpush1.msra.mxu0 %v309
      %418 = vmatprep.subr.mxu0 0.0
      %419 = vmatpush1.msra.mxu0 %v308
      %420 = vmatprep.subr.mxu0 0.0
      %421 = vmatpush1.msra.mxu0 %v307
      %422 = vmatprep.subr.mxu0 0.0
      %423 = vmatpush1.msra.mxu0 %v306
      %424 = vmatprep.subr.mxu0 0.0
      %425 = vmatpush1.msra.mxu0 %v305
      %426 = vmatprep.subr.mxu0 0.0
      %427 = vmatpush2.msra.mxu0 0.0
      %428 = vmatprep.subr.mxu0 0.0
      %429 = vmatpush2.msra.mxu0 0.0
      %430 = vmatprep.subr.mxu0 0.0
      %431 = vmatpush2.msra.mxu0 0.0
      %432 = vmatprep.subr.mxu0 0.0
      %433 = vmatpush2.msra.mxu0 0.0
      %434 = vmatprep.subr.mxu0 0.0
      %435 = vmatpush2.msra.mxu0 0.0
      %436 = vmatprep.subr.mxu0 0.0
      %437 = vmatpush2.msra.mxu0 0.0
      %438 = vmatprep.subr.mxu0 0.0
      %439 = vmatpush2.msra.mxu0 0.0
      %440 = vmatprep.subr.mxu0 0.0
      %441 = vmatpush2.msra.mxu0 0.0
      %442 = vmatprep.subr.mxu0 0.0
      %443 = vmatpush2.msra.mxu0 0.0
      %444 = vmatprep.subr.mxu0 0.0
      %445 = vmatpush2.msra.mxu0 0.0
      %446 = vmatprep.subr.mxu0 0.0
      %447 = vmatpush2.msra.mxu0 0.0
      %448 = vmatprep.subr.mxu0 0.0
      %449 = vmatpush2.msra.mxu0 0.0
      %450 = vmatprep.subr.mxu0 0.0
      %451 = vmatpush2.msra.mxu0 0.0
      %452 = vmatprep.subr.mxu0 0.0
      %453 = vmatpush2.msra.mxu0 0.0
      %454 = vmatprep.subr.mxu0 0.0
      %455 = vmatpush2.msra.mxu0 0.0
      %456 = vmatprep.subr.mxu0 0.0
      %457 = vmatpush2.msra.mxu0 0.0
      %458 = vmatprep.mubr.f32.mxu0 0.0
      %459 = vmatmul.mubr.f32.gmra.mxu0 %v371
      %v460 = vpop.f32.mrf.mxu0
      %v461 = vadd.f32 %v332, %v460
      %v462 = vpop.f32.mrf.mxu0
      %463 = vmatprep.mubr.f32.mxu0 0.0
      %464 = vmatmul.mubr.f32.gmra.mxu0 %v374
      %v465 = vpop.f32.mrf.mxu0
      %v466 = vadd.f32 %v337, %v465
      %v467 = vpop.f32.mrf.mxu0
      %468 = vmatprep.mubr.f32.mxu0 0.0
      %469 = vmatmul.mubr.f32.gmra.mxu0 %v377
      %v470 = vpop.f32.mrf.mxu0
      %v471 = vadd.f32 %v342, %v470
      %v472 = vpop.f32.mrf.mxu0
      %473 = vmatprep.mubr.f32.mxu0 0.0
      %474 = vmatmul.mubr.f32.gmra.mxu0 %v380
      %v475 = vpop.f32.mrf.mxu0
      %v476 = vadd.f32 %v347, %v475
      %v477 = vpop.f32.mrf.mxu0
      %478 = vmatprep.mubr.f32.mxu0 0.0
      %479 = vmatmul.mubr.f32.gmra.mxu0 %v383
      %v480 = vpop.f32.mrf.mxu0
      %v481 = vadd.f32 %v352, %v480
      %v482 = vpop.f32.mrf.mxu0
      %483 = vmatprep.mubr.f32.mxu0 0.0
      %484 = vmatmul.mubr.f32.gmra.mxu0 %v386
      %v485 = vpop.f32.mrf.mxu0
      %v486 = vadd.f32 %v357, %v485
      %v487 = vpop.f32.mrf.mxu0
      %488 = vmatprep.mubr.f32.mxu0 0.0
      %489 = vmatmul.mubr.f32.gmra.mxu0 %v389
      %v490 = vpop.f32.mrf.mxu0
      %v491 = vadd.f32 %v362, %v490
      %v492 = vpop.f32.mrf.mxu0
      %493 = vmatprep.mubr.f32.mxu0 0.0
      %494 = vmatmul.mubr.f32.gmra.mxu0 %v392
      %v495 = vpop.f32.mrf.mxu0
      %v496 = vadd.f32 %v367, %v495
      %v497 = vpop.f32.mrf.mxu0
      %498 = vdwg.mxu0
      %v499 = vmax.f32 %v461, 0.0
      %v500 = vmax.f32 %v466, 0.0
      %v501 = vmax.f32 %v471, 0.0
      %v502 = vmax.f32 %v476, 0.0
      %v503 = vmax.f32 %v481, 0.0
      %v504 = vmax.f32 %v486, 0.0
      %v505 = vmax.f32 %v491, 0.0
      %v506 = vmax.f32 %v496, 0.0
      %v507 = vld [vmem:[%s1 + $0x80] sm:$0xff]
      %v508 = vld [vmem:[%s1 + $0x88] sm:$0xff]
      %v509 = vld [vmem:[%s1 + $0x90] sm:$0xff]
      %v510 = vld [vmem:[%s1 + $0x98] sm:$0xff]
      %v511 = vld [vmem:[%s1 + $0xa0] sm:$0xff]
      %v512 = vld [vmem:[%s1 + $0xa8] sm:$0xff]
      %v513 = vld [vmem:[%s1 + $0xb0] sm:$0xff]
      %v514 = vld [vmem:[%s1 + $0xb8] sm:$0xff]
      %v515 = vld [vmem:[%s2 + $0x80] sm:$0xff]
      %v516 = vld [vmem:[%s2 + $0x88] sm:$0xff]
      %v517 = vld [vmem:[%s2 + $0x90] sm:$0xff]
      %v518 = vld [vmem:[%s2 + $0x98] sm:$0xff]
      %v519 = vld [vmem:[%s2 + $0xa0] sm:$0xff]
      %v520 = vld [vmem:[%s2 + $0xa8] sm:$0xff]
      %v521 = vld [vmem:[%s2 + $0xb0] sm:$0xff]
      %v522 = vld [vmem:[%s2 + $0xb8] sm:$0xff]
      %524 = vset.pattern.permute.xlu0 0
      %525 = vperm.xlu0 %524, %v515
      %v526 = vpop.permute.xlu0 %525
      %529 = vset.pattern.permute.xlu0 0
      %530 = vperm.xlu0 %529, %v516
      %v531 = vpop.permute.xlu0 %530
      %534 = vset.pattern.permute.xlu0 0
      %535 = vperm.xlu0 %534, %v517
      %v536 = vpop.permute.xlu0 %535
      %539 = vset.pattern.permute.xlu0 0
      %540 = vperm.xlu0 %539, %v518
      %v541 = vpop.permute.xlu0 %540
      %544 = vset.pattern.permute.xlu0 0
      %545 = vperm.xlu0 %544, %v519
      %v546 = vpop.permute.xlu0 %545
      %549 = vset.pattern.permute.xlu0 0
      %550 = vperm.xlu0 %549, %v520
      %v551 = vpop.permute.xlu0 %550
      %554 = vset.pattern.permute.xlu0 0
      %555 = vperm.xlu0 %554, %v521
      %v556 = vpop.permute.xlu0 %555
      %559 = vset.pattern.permute.xlu0 0
      %560 = vperm.xlu0 %559, %v522
      %v561 = vpop.permute.xlu0 %560
      %v564 = vsel %vm369, %v507, 0
      %v567 = vsel %vm369, %v508, 0
      %v570 = vsel %vm369, %v509, 0
      %v573 = vsel %vm369, %v510, 0
      %v576 = vsel %vm369, %v511, 0
      %v579 = vsel %vm369, %v512, 0
      %v582 = vsel %vm369, %v513, 0
      %v585 = vsel %vm369, %v514, 0
      %587 = vmatprep.subr.mxu0 0.0
      %588 = vmatpush1.msra.mxu0 0.0
      %589 = vmatprep.subr.mxu0 0.0
      %590 = vmatpush1.msra.mxu0 0.0
      %591 = vmatprep.subr.mxu0 0.0
      %592 = vmatpush1.msra.mxu0 0.0
      %593 = vmatprep.subr.mxu0 0.0
      %594 = vmatpush1.msra.mxu0 0.0
      %595 = vmatprep.subr.mxu0 0.0
      %596 = vmatpush1.msra.mxu0 0.0
      %597 = vmatprep.subr.mxu0 0.0
      %598 = vmatpush1.msra.mxu0 0.0
      %599 = vmatprep.subr.mxu0 0.0
      %600 = vmatpush1.msra.mxu0 0.0
      %601 = vmatprep.subr.mxu0 0.0
      %602 = vmatpush1.msra.mxu0 0.0
      %603 = vmatprep.subr.mxu0 0.0
      %604 = vmatpush1.msra.mxu0 %v506
      %605 = vmatprep.subr.mxu0 0.0
      %606 = vmatpush1.msra.mxu0 %v505
      %607 = vmatprep.subr.mxu0 0.0
      %608 = vmatpush1.msra.mxu0 %v504
      %609 = vmatprep.subr.mxu0 0.0
      %610 = vmatpush1.msra.mxu0 %v503
      %611 = vmatprep.subr.mxu0 0.0
      %612 = vmatpush1.msra.mxu0 %v502
      %613 = vmatprep.subr.mxu0 0.0
      %614 = vmatpush1.msra.mxu0 %v501
      %615 = vmatprep.subr.mxu0 0.0
      %616 = vmatpush1.msra.mxu0 %v500
      %617 = vmatprep.subr.mxu0 0.0
      %618 = vmatpush1.msra.mxu0 %v499
      %619 = vmatprep.subr.mxu0 0.0
      %620 = vmatpush2.msra.mxu0 0.0
      %621 = vmatprep.subr.mxu0 0.0
      %622 = vmatpush2.msra.mxu0 0.0
      %623 = vmatprep.subr.mxu0 0.0
      %624 = vmatpush2.msra.mxu0 0.0
      %625 = vmatprep.subr.mxu0 0.0
      %626 = vmatpush2.msra.mxu0 0.0
      %627 = vmatprep.subr.mxu0 0.0
      %628 = vmatpush2.msra.mxu0 0.0
      %629 = vmatprep.subr.mxu0 0.0
      %630 = vmatpush2.msra.mxu0 0.0
      %631 = vmatprep.subr.mxu0 0.0
      %632 = vmatpush2.msra.mxu0 0.0
      %633 = vmatprep.subr.mxu0 0.0
      %634 = vmatpush2.msra.mxu0 0.0
      %635 = vmatprep.subr.mxu0 0.0
      %636 = vmatpush2.msra.mxu0 0.0
      %637 = vmatprep.subr.mxu0 0.0
      %638 = vmatpush2.msra.mxu0 0.0
      %639 = vmatprep.subr.mxu0 0.0
      %640 = vmatpush2.msra.mxu0 0.0
      %641 = vmatprep.subr.mxu0 0.0
      %642 = vmatpush2.msra.mxu0 0.0
      %643 = vmatprep.subr.mxu0 0.0
      %644 = vmatpush2.msra.mxu0 0.0
      %645 = vmatprep.subr.mxu0 0.0
      %646 = vmatpush2.msra.mxu0 0.0
      %647 = vmatprep.subr.mxu0 0.0
      %648 = vmatpush2.msra.mxu0 0.0
      %649 = vmatprep.subr.mxu0 0.0
      %650 = vmatpush2.msra.mxu0 0.0
      %651 = vmatprep.mubr.f32.mxu0 0.0
      %652 = vmatmul.mubr.f32.gmra.mxu0 %v564
      %v653 = vpop.f32.mrf.mxu0
      %v654 = vadd.f32 %v526, %v653
      %v655 = vpop.f32.mrf.mxu0
      %656 = vmatprep.mubr.f32.mxu0 0.0
      %657 = vmatmul.mubr.f32.gmra.mxu0 %v567
      %v658 = vpop.f32.mrf.mxu0
      %v659 = vadd.f32 %v531, %v658
      %v660 = vpop.f32.mrf.mxu0
      %661 = vmatprep.mubr.f32.mxu0 0.0
      %662 = vmatmul.mubr.f32.gmra.mxu0 %v570
      %v663 = vpop.f32.mrf.mxu0
      %v664 = vadd.f32 %v536, %v663
      %v665 = vpop.f32.mrf.mxu0
      %666 = vmatprep.mubr.f32.mxu0 0.0
      %667 = vmatmul.mubr.f32.gmra.mxu0 %v573
      %v668 = vpop.f32.mrf.mxu0
      %v669 = vadd.f32 %v541, %v668
      %v670 = vpop.f32.mrf.mxu0
      %671 = vmatprep.mubr.f32.mxu0 0.0
      %672 = vmatmul.mubr.f32.gmra.mxu0 %v576
      %v673 = vpop.f32.mrf.mxu0
      %v674 = vadd.f32 %v546, %v673
      %v675 = vpop.f32.mrf.mxu0
      %676 = vmatprep.mubr.f32.mxu0 0.0
      %677 = vmatmul.mubr.f32.gmra.mxu0 %v579
      %v678 = vpop.f32.mrf.mxu0
      %v679 = vadd.f32 %v551, %v678
      %v680 = vpop.f32.mrf.mxu0
      %681 = vmatprep.mubr.f32.mxu0 0.0
      %682 = vmatmul.mubr.f32.gmra.mxu0 %v582
      %v683 = vpop.f32.mrf.mxu0
      %v684 = vadd.f32 %v556, %v683
      %v685 = vpop.f32.mrf.mxu0
      %686 = vmatprep.mubr.f32.mxu0 0.0
      %687 = vmatmul.mubr.f32.gmra.mxu0 %v585
      %v688 = vpop.f32.mrf.mxu0
      %v689 = vadd.f32 %v561, %v688
      %v690 = vpop.f32.mrf.mxu0
      %691 = vdwg.mxu0
      %v692 = vmax.f32 %v654, 0.0
      %v693 = vmax.f32 %v659, 0.0
      %v694 = vmax.f32 %v664, 0.0
      %v695 = vmax.f32 %v669, 0.0
      %v696 = vmax.f32 %v674, 0.0
      %v697 = vmax.f32 %v679, 0.0
      %v698 = vmax.f32 %v684, 0.0
      %v699 = vmax.f32 %v689, 0.0
      %v700 = vld [vmem:[%s1 + $0xc0] sm:$0xff]
      %v701 = vld [vmem:[%s2 + $0xc0] sm:$0xff]
      %703 = vset.pattern.permute.xlu0 0
      %704 = vperm.xlu0 %703, %v701
      %v705 = vpop.permute.xlu0 %704
      %v708 = vsel %vm369, %v700, 0
      %710 = vmatprep.subr.mxu0 0.0
      %711 = vmatpush1.msra.mxu0 0.0
      %712 = vmatprep.subr.mxu0 0.0
      %713 = vmatpush1.msra.mxu0 0.0
      %714 = vmatprep.subr.mxu0 0.0
      %715 = vmatpush1.msra.mxu0 0.0
      %716 = vmatprep.subr.mxu0 0.0
      %717 = vmatpush1.msra.mxu0 0.0
      %718 = vmatprep.subr.mxu0 0.0
      %719 = vmatpush1.msra.mxu0 0.0
      %720 = vmatprep.subr.mxu0 0.0
      %721 = vmatpush1.msra.mxu0 0.0
      %722 = vmatprep.subr.mxu0 0.0
      %723 = vmatpush1.msra.mxu0 0.0
      %724 = vmatprep.subr.mxu0 0.0
      %725 = vmatpush1.msra.mxu0 0.0
      %726 = vmatprep.subr.mxu0 0.0
      %727 = vmatpush1.msra.mxu0 %v699
      %728 = vmatprep.subr.mxu0 0.0
      %729 = vmatpush1.msra.mxu0 %v698
      %730 = vmatprep.subr.mxu0 0.0
      %731 = vmatpush1.msra.mxu0 %v697
      %732 = vmatprep.subr.mxu0 0.0
      %733 = vmatpush1.msra.mxu0 %v696
      %734 = vmatprep.subr.mxu0 0.0
      %735 = vmatpush1.msra.mxu0 %v695
      %736 = vmatprep.subr.mxu0 0.0
      %737 = vmatpush1.msra.mxu0 %v694
      %738 = vmatprep.subr.mxu0 0.0
      %739 = vmatpush1.msra.mxu0 %v693
      %740 = vmatprep.subr.mxu0 0.0
      %741 = vmatpush1.msra.mxu0 %v692
      %742 = vmatprep.subr.mxu0 0.0
      %743 = vmatpush2.msra.mxu0 0.0
      %744 = vmatprep.subr.mxu0 0.0
      %745 = vmatpush2.msra.mxu0 0.0
      %746 = vmatprep.subr.mxu0 0.0
      %747 = vmatpush2.msra.mxu0 0.0
      %748 = vmatprep.subr.mxu0 0.0
      %749 = vmatpush2.msra.mxu0 0.0
      %750 = vmatprep.subr.mxu0 0.0
      %751 = vmatpush2.msra.mxu0 0.0
      %752 = vmatprep.subr.mxu0 0.0
      %753 = vmatpush2.msra.mxu0 0.0
      %754 = vmatprep.subr.mxu0 0.0
      %755 = vmatpush2.msra.mxu0 0.0
      %756 = vmatprep.subr.mxu0 0.0
      %757 = vmatpush2.msra.mxu0 0.0
      %758 = vmatprep.subr.mxu0 0.0
      %759 = vmatpush2.msra.mxu0 0.0
      %760 = vmatprep.subr.mxu0 0.0
      %761 = vmatpush2.msra.mxu0 0.0
      %762 = vmatprep.subr.mxu0 0.0
      %763 = vmatpush2.msra.mxu0 0.0
      %764 = vmatprep.subr.mxu0 0.0
      %765 = vmatpush2.msra.mxu0 0.0
      %766 = vmatprep.subr.mxu0 0.0
      %767 = vmatpush2.msra.mxu0 0.0
      %768 = vmatprep.subr.mxu0 0.0
      %769 = vmatpush2.msra.mxu0 0.0
      %770 = vmatprep.subr.mxu0 0.0
      %771 = vmatpush2.msra.mxu0 0.0
      %772 = vmatprep.subr.mxu0 0.0
      %773 = vmatpush2.msra.mxu0 0.0
      %774 = vmatprep.mubr.f32.mxu0 0.0
      %775 = vmatmul.mubr.f32.gmra.mxu0 %v708
      %v776 = vpop.f32.mrf.mxu0
      %v777 = vadd.f32 %v705, %v776
      %v778 = vpop.f32.mrf.mxu0
      %779 = vdwg.mxu0
      %v781 = vrot.slane %v777, 7
      %v783 = vadd.f32 %v777, %v781
      %v784 = vmul.f32 %v783, 0.0165
      %v786 = vrot.slane %v166, 1
      %v788 = vadd.f32 %v166, %v786
      %v789 = vmul.f32 %v788, 0.5
      %v791 = vrot.slane %v789, 7
      %v793 = vsub.f32 %v784, %v791
      %v794 = vand.u32 2147483647, %v793
      %v795 = vrcp.pop %v166
      %v796 = vmul.f32 1.0, %v795
      %v797 = vsub.f32 %v777, %v166
      %v799 = vrot.slane %v796, 6
      %v801 = vmul.f32 %v797, %v799
      %v802 = vrot.slane %v796, 5
      %v804 = vmul.f32 %v797, %v802
      %v805 = vmul.f32 %v801, 0.00329
      %v806 = vmul.f32 %v166, 0.002
      %v807 = vadd.f32 %v805, %v806
      %v809 = vrot.slane %v807, 4
      %v811 = vsub.f32 %v166, %v809
      %v812 = vand.u32 2147483647, %v811
      %v813 = vmul.f32 %v804, 0.00329
      %v814 = vadd.f32 %v813, %v806
      %v816 = vrot.slane %v814, 4
      %v818 = vsub.f32 %v166, %v816
      %v819 = vand.u32 2147483647, %v818
      %v821 = vrot.slane %v812, 3
      %v823 = vadd.f32 %v794, %v821
      %v825 = vrot.slane %v819, 4
      %v827 = vadd.f32 %v823, %v825
      %v828 = vlaneseq
      %v829 = vshrl.u32 %v828, 7
      %vm830 = vcmp.eq.s32.totalorder %v829, 4
      %v831 = vlaneseq
      %v832 = vshrl.u32 %v831, 7
      %v833 = vsub.s32 1, %v832
      %v834 = vrot.slane %v827, %v833
      %v835 = vsel %vm830, %v834, %v777
      %836 = vst [vmem:[%s165] sm:$0xff] %v835
      %p837 = scmp.lt.s32.totalorder %s14, 1
      %s838 = scalar_select %p837, %s14, 1
      %s839 = smul.addr %s838, 8
      %s840 = scalar_lea.vmem %s3, %s839
      // Predicated region
      $region33: #{wheel_dynamics_pinn_forward.1} parent=31 // pred_check
        %p841 = pneg %p100
      $region34: #{wheel_dynamics_pinn_forward.1} parent=31 // pred_check_branch
        %843 = sbr.rel (%p841) target = $region36
      $region35: #{wheel_dynamics_pinn_forward.1} parent=31 // pred_region
        _
      $region36: #{wheel_dynamics_pinn_forward.1} parent=31 // pred_fallthru
        _
    $region32: #{wheel_dynamics_pinn_forward.1} parent=5 // pred_fallthru
      _
    %p844 = scmp.le.s32.totalorder 2, %s9
    // Predicated region
    $region37: #{wheel_dynamics_pinn_forward.1} parent=5 // pred_check
      %p845 = pneg %p844
    $region38: #{wheel_dynamics_pinn_forward.1} parent=5 // pred_check_branch
      %847 = sbr.rel (%p845) target = $region40
    $region39: #{wheel_dynamics_pinn_forward.1} parent=5 // pred_region
      %s848 = ssub.s32 %s9, 2
      // Predicated region
      $region41: #{wheel_dynamics_pinn_forward.1} parent=39 // pred_check
        %p849 = pneg %p106
      $region42: #{wheel_dynamics_pinn_forward.1} parent=39 // pred_check_branch
        %851 = sbr.rel (%p849) target = $region44
      $region43: #{wheel_dynamics_pinn_forward.1} parent=39 // pred_region
        %p852 = scmp.lt.s32.totalorder %s15, 1
        %s853 = scalar_select %p852, %s15, 1
        %s854 = smul.addr %s853, 8
        %s855 = scalar_lea.vmem %s3, %s854
      $region44: #{wheel_dynamics_pinn_forward.1} parent=39 // pred_fallthru
        _
    $region40: #{wheel_dynamics_pinn_forward.1} parent=5 // pred_fallthru
      _
  $region6: #{wheel_dynamics_pinn_forward.1} parent=0 // loop_footer
    %s13 = sadd.s32 1, %s9
  $region7: #{wheel_dynamics_pinn_forward.1} parent=0 // loop_footer_branch
    %8 = sbr.rel target = $region3
  $region8: #{wheel_dynamics_pinn_forward.1} parent=0 // loop_exit
    _

</llo_original>
